<compile_context>
chip_gen: v5e
topology: v5e:2x2
jax: 0.10.0
libtpu: 0.0.40
codegen_flags: <defaults>
</compile_context>

<pallas_src>
import math
import functools

import jax
import jax.numpy as jnp
from jax.experimental import pallas as pl
from jax.experimental.pallas import tpu as pltpu

_MAX_TILE = 512
_VMEM_LIMIT = 48 * 1024 * 1024          # scoped VMEM request (v7x-safe)
_RESIDENT_B_BUDGET = 12 * 1024 * 1024   # budget for (double-buffered) resident support


def _round_up(x: int, m: int) -> int:
    return ((x + m - 1) // m) * m


def _pick_tile(dim_padded: int, max_tile: int = _MAX_TILE) -> int:
    """Largest multiple of 128 that divides dim_padded and is <= max_tile."""
    t = min(max_tile, dim_padded)
    t = (t // 128) * 128
    while dim_padded % t != 0:
        t -= 128
    return t


def _pad2d(a, rows: int, cols: int):
    pr, pc = rows - a.shape[0], cols - a.shape[1]
    if pr == 0 and pc == 0:
        return a
    return jnp.pad(a, ((0, pr), (0, pc)))


# ---------------------------------------------------------------------------
# Kernel bodies
# ---------------------------------------------------------------------------
def _matmul_kernel(a_ref, b_ref, o_ref, acc_ref):
    """o = a @ b, accumulated over the K grid axis in a VMEM f32 scratch."""
    @pl.when(pl.program_id(2) == 0)
    def _():
        acc_ref[...] = jnp.zeros_like(acc_ref)

    acc_ref[...] += jnp.dot(a_ref[...], b_ref[...],
                            preferred_element_type=jnp.float32)

    @pl.when(pl.program_id(2) == pl.num_programs(2) - 1)
    def _():
        o_ref[...] = acc_ref[...].astype(o_ref.dtype)


def _matmul_bias_kernel(a_ref, b_ref, bias_ref, o_ref, acc_ref):
    """o = a @ b + bias; bias added only in the last-K epilogue."""
    @pl.when(pl.program_id(2) == 0)
    def _():
        acc_ref[...] = jnp.zeros_like(acc_ref)

    acc_ref[...] += jnp.dot(a_ref[...], b_ref[...],
                            preferred_element_type=jnp.float32)

    @pl.when(pl.program_id(2) == pl.num_programs(2) - 1)
    def _():
        o_ref[...] = (acc_ref[...] + bias_ref[...]).astype(o_ref.dtype)


def _matmul_resident_b_kernel(a_ref, b_ref, o_ref, acc_ref, *, tk):
    """o = a @ b with B fully VMEM-resident; slice B per K grid step."""
    kk = pl.program_id(1)

    @pl.when(kk == 0)
    def _():
        acc_ref[...] = jnp.zeros_like(acc_ref)

    k0 = pl.multiple_of(kk * tk, tk)
    acc_ref[...] += jnp.dot(a_ref[...], b_ref[pl.ds(k0, tk), :],
                            preferred_element_type=jnp.float32)

    @pl.when(kk == pl.num_programs(1) - 1)
    def _():
        o_ref[...] = acc_ref[...].astype(o_ref.dtype)


def _matmul_resident_b_bias_kernel(a_ref, b_ref, bias_ref, o_ref, acc_ref, *, tk):
    """o = a @ b + bias with B fully VMEM-resident."""
    kk = pl.program_id(1)

    @pl.when(kk == 0)
    def _():
        acc_ref[...] = jnp.zeros_like(acc_ref)

    k0 = pl.multiple_of(kk * tk, tk)
    acc_ref[...] += jnp.dot(a_ref[...], b_ref[pl.ds(k0, tk), :],
                            preferred_element_type=jnp.float32)

    @pl.when(kk == pl.num_programs(1) - 1)
    def _():
        o_ref[...] = (acc_ref[...] + bias_ref[...]).astype(o_ref.dtype)


def _fused_gcn_kernel(x_ref, w_ref, adj_ref, o_ref):
    """Small-shape fast path: out = adj @ (x @ w), single kernel."""
    s = jnp.dot(x_ref[...], w_ref[...],
                preferred_element_type=jnp.float32).astype(x_ref.dtype)
    o_ref[...] = jnp.dot(adj_ref[...], s,
                         preferred_element_type=jnp.float32).astype(o_ref.dtype)


def _fused_gcn_bias_kernel(x_ref, w_ref, adj_ref, bias_ref, o_ref):
    s = jnp.dot(x_ref[...], w_ref[...],
                preferred_element_type=jnp.float32).astype(x_ref.dtype)
    out = jnp.dot(adj_ref[...], s,
                  preferred_element_type=jnp.float32) + bias_ref[...]
    o_ref[...] = out.astype(o_ref.dtype)


# ---------------------------------------------------------------------------
# pallas_call wrappers (operands must already be padded to 128 multiples)
# ---------------------------------------------------------------------------
def _tiled_matmul(a, b, bias2d=None, *, tm, tk, tn, out_dtype):
    m, k = a.shape
    k2, n = b.shape
    assert k == k2 and m % tm == 0 and k % tk == 0 and n % tn == 0

    grid = (m // tm, n // tn, k // tk)
    out_itemsize = jnp.dtype(out_dtype).itemsize

    cost = pl.CostEstimate(
        flops=2 * m * k * n,
        transcendentals=0,
        bytes_accessed=(a.dtype.itemsize * m * k * (n // tn)
                        + b.dtype.itemsize * k * n * (m // tm)
                        + out_itemsize * m * n
                        + (4 * n if bias2d is not None else 0)),
    )

    in_specs = [
        pl.BlockSpec((tm, tk), lambda i, j, kk: (i, kk)),   # A tile
        pl.BlockSpec((tk, tn), lambda i, j, kk: (kk, j)),   # B tile
    ]
    inputs = (a, b)
    kernel = _matmul_kernel
    if bias2d is not None:
        # Grid-invariant along i and k: no re-DMA of the bias per K step.
        in_specs.append(pl.BlockSpec((1, tn), lambda i, j, kk: (0, j)))
        inputs = (a, b, bias2d)
        kernel = _matmul_bias_kernel

    return pl.pallas_call(
        kernel,
        out_shape=jax.ShapeDtypeStruct((m, n), out_dtype),
        grid_spec=pltpu.PrefetchScalarGridSpec(
            num_scalar_prefetch=0,
            grid=grid,
            in_specs=in_specs,
            out_specs=pl.BlockSpec((tm, tn), lambda i, j, kk: (i, j)),
            scratch_shapes=[pltpu.VMEM((tm, tn), jnp.float32)],
        ),
        compiler_params=pltpu.CompilerParams(
            dimension_semantics=("parallel", "parallel", "arbitrary"),
            vmem_limit_bytes=_VMEM_LIMIT,
        ),
        cost_estimate=cost,
    )(*inputs)


def _matmul_resident_b(a, b, bias2d=None, *, tm, tk, out_dtype):
    """a @ b (+ bias) with the full B operand VMEM-resident (one HBM pass for
    both a and b)."""
    m, k_total = a.shape
    k2, n = b.shape
    assert k_total == k2 and m % tm == 0 and k_total % tk == 0

    grid = (m // tm, k_total // tk)
    out_itemsize = jnp.dtype(out_dtype).itemsize

    cost = pl.CostEstimate(
        flops=2 * m * k_total * n,
        transcendentals=0,
        bytes_accessed=(a.dtype.itemsize * m * k_total
                        + b.dtype.itemsize * k_total * n
                        + out_itemsize * m * n
                        + (4 * n if bias2d is not None else 0)),
    )

    in_specs = [
        pl.BlockSpec((tm, tk), lambda i, kk: (i, kk)),        # adj tile
        # Full support array, constant index_map -> DMA'd from HBM once and
        # kept resident in VMEM across all grid steps.
        pl.BlockSpec((k_total, n), lambda i, kk: (0, 0)),
    ]
    inputs = (a, b)
    if bias2d is not None:
        in_specs.append(pl.BlockSpec((1, n), lambda i, kk: (0, 0)))
        inputs = (a, b, bias2d)
        kernel = functools.partial(_matmul_resident_b_bias_kernel, tk=tk)
    else:
        kernel = functools.partial(_matmul_resident_b_kernel, tk=tk)

    return pl.pallas_call(
        kernel,
        out_shape=jax.ShapeDtypeStruct((m, n), out_dtype),
        grid_spec=pltpu.PrefetchScalarGridSpec(
            num_scalar_prefetch=0,
            grid=grid,
            in_specs=in_specs,
            out_specs=pl.BlockSpec((tm, n), lambda i, kk: (i, 0)),
            scratch_shapes=[pltpu.VMEM((tm, n), jnp.float32)],
        ),
        compiler_params=pltpu.CompilerParams(
            dimension_semantics=("parallel", "arbitrary"),
            vmem_limit_bytes=_VMEM_LIMIT,
        ),
        cost_estimate=cost,
    )(*inputs)


def _fused_small_gcn(x_p, w_p, adj_p, bias2d=None, *, out_dtype):
    n_p, f_in_p = x_p.shape
    f_out_p = w_p.shape[1]

    in_specs = [
        pl.BlockSpec((n_p, f_in_p), lambda i: (0, 0)),
        pl.BlockSpec((f_in_p, f_out_p), lambda i: (0, 0)),
        pl.BlockSpec((n_p, n_p), lambda i: (0, 0)),
    ]
    inputs = (x_p, w_p, adj_p)
    kernel = _fused_gcn_kernel
    if bias2d is not None:
        in_specs.append(pl.BlockSpec((1, f_out_p), lambda i: (0, 0)))
        inputs = (x_p, w_p, adj_p, bias2d)
        kernel = _fused_gcn_bias_kernel

    return pl.pallas_call(
        kernel,
        out_shape=jax.ShapeDtypeStruct((n_p, f_out_p), out_dtype),
        grid=(1,),
        in_specs=in_specs,
        out_specs=pl.BlockSpec((n_p, f_out_p), lambda i: (0, 0)),
        compiler_params=pltpu.CompilerParams(
            dimension_semantics=("arbitrary",),
            vmem_limit_bytes=_VMEM_LIMIT,
        ),
    )(*inputs)


# ---------------------------------------------------------------------------
# Public GCN forward
# ---------------------------------------------------------------------------
@functools.partial(jax.jit, static_argnames=("compute_dtype",))
def graph_convolution(x, adj, weight, bias=None, *, compute_dtype=jnp.float32):
    """Pallas GCN forward: adj @ (x @ weight) + bias.

    x:      [N, F_in]
    adj:    [N, N]
    weight: [F_in, F_out]
    bias:   [F_out] or None
    compute_dtype: dtype of the matmul inputs (f32 default; bf16 for speed;
                   accumulation is always f32 via preferred_element_type).
    returns [N, F_out] in x.dtype
    """
    n, f_in = x.shape
    f_out = weight.shape[1]
    out_dtype = x.dtype
    cd = jax.dtypes.canonicalize_dtype(compute_dtype)

    # Pad only to 128 multiples (lane/sublane legality); never to tile
    # multiples.  Zero padding preserves both matmuls and the bias add.
    n_p = _round_up(n, 128)
    f_in_p = _round_up(f_in, 128)
    f_out_p = _round_up(f_out, 128)

    x_p = _pad2d(x.astype(cd), n_p, f_in_p)
    adj_p = _pad2d(adj.astype(cd), n_p, n_p)
    w_p = _pad2d(weight.astype(cd), f_in_p, f_out_p)
    bias_p = None
    if bias is not None:
        # Bias stays f32: it is added to the f32 accumulator in the epilogue.
        bias_p = _pad2d(bias.reshape(1, f_out).astype(jnp.float32), 1, f_out_p)

    # --- Small-shape fast path: one fused kernel, no K grid, no HBM support.
    if n_p <= _MAX_TILE and f_in_p <= _MAX_TILE and f_out_p <= _MAX_TILE:
        out_p = _fused_small_gcn(x_p, w_p, adj_p, bias_p, out_dtype=out_dtype)
        return out_p[:n, :f_out]

    # --- General path: two tiled matmuls -----------------------------------
    t_node = _pick_tile(n_p)
    t_fin = _pick_tile(f_in_p)
    t_fout = _pick_tile(f_out_p)

    # Keep >=2 row tiles when possible so both v7x TensorCores get work even
    # if the column grid axis collapses to a single tile.
    if n_p // t_node == 1 and n_p >= 256 and (n_p // 2) % 128 == 0:
        t_node = n_p // 2

    # support = X @ W, computed exactly once, stored in compute dtype.
    support = _tiled_matmul(x_p, w_p, tm=t_node, tk=t_fin, tn=t_fout,
                            out_dtype=cd)

    # output = A @ support (+ bias).  Prefer the VMEM-resident-support kernel
    # so adj is streamed from HBM exactly once and support is never re-read.
    support_bytes = n_p * f_out_p * cd.itemsize
    resident_ok = (t_fout == f_out_p) and (2 * support_bytes <= _RESIDENT_B_BUDGET)
    if resident_ok:
        out_p = _matmul_resident_b(adj_p, support, bias_p,
                                   tm=t_node, tk=t_node, out_dtype=out_dtype)
    else:
        out_p = _tiled_matmul(adj_p, support, bias2d=bias_p,
                              tm=t_node, tk=t_node, tn=t_fout,
                              out_dtype=out_dtype)

    return out_p[:n, :f_out]


def init_gcn_params(key, in_features, out_features, bias=True):
    """Deterministic re-implementation of GraphConvolution.reset_parameters."""
    stdv = 1.0 / math.sqrt(out_features)
    kw, kb = jax.random.split(key)
    weight = jax.random.uniform(
        kw, (in_features, out_features), minval=-stdv, maxval=stdv,
        dtype=jnp.float32)
    b = None
    if bias:
        b = jax.random.uniform(
            kb, (out_features,), minval=-stdv, maxval=stdv, dtype=jnp.float32)
    return weight, b


if __name__ == "__main__":
    key = jax.random.PRNGKey(0)
    k_x, k_adj, k_p, k_x2, k_adj2, k_p2 = jax.random.split(key, 6)

    def ref_gcn(x, adj, w, b):
        with jax.default_matmul_precision("highest"):
            out = adj @ (x @ w)
        return out if b is None else out + b[None, :]

    def rel_err(a, b):
        return float(jnp.linalg.norm(a.astype(jnp.float32) - b)
                     / (jnp.linalg.norm(b) + 1e-30))

    # --- Test 1: small shapes -> fused single-kernel fast path --------------
    N, F_IN, F_OUT = 8, 16, 32
    x = jax.random.normal(k_x, (N, F_IN), dtype=jnp.float32)
    a_raw = jax.random.uniform(k_adj, (N, N), dtype=jnp.float32)
    adj = 0.5 * (a_raw + a_raw.T)
    weight, bias = init_gcn_params(k_p, F_IN, F_OUT, bias=True)

    out = jax.block_until_ready(graph_convolution(x, adj, weight, bias))
    ref = ref_gcn(x, adj, weight, bias)
    assert out.shape == (N, F_OUT)
    assert jnp.allclose(out, ref, atol=1e-4, rtol=1e-4)

    out_nb = jax.block_until_ready(graph_convolution(x, adj, weight, None))
    assert jnp.allclose(out_nb, ref_gcn(x, adj, weight, None),
                        atol=1e-4, rtol=1e-4)

    # --- Test 2: larger shapes -> tiled X@W + VMEM-resident support ---------
    N2, F_IN2, F_OUT2 = 640, 200, 96
    x2 = jax.random.normal(k_x2, (N2, F_IN2), dtype=jnp.float32)
    a2_raw = jax.random.uniform(k_adj2, (N2, N2), dtype=jnp.float32)
    adj2 = 0.5 * (a2_raw + a2_raw.T)
    w2, b2 = init_gcn_params(k_p2, F_IN2, F_OUT2, bias=True)
    ref2 = ref_gcn(x2, adj2, w2, b2)

    out2 = jax.block_until_ready(graph_convolution(x2, adj2, w2, b2))
    assert out2.shape == (N2, F_OUT2)
    assert rel_err(out2, ref2) < 1e-3

    # Same shapes with the bf16 compute path (f32 accumulation); looser
    # tolerance because the matmul inputs are bf16.
    out2_bf16 = jax.block_until_ready(
        graph_convolution(x2, adj2, w2, b2, compute_dtype=jnp.bfloat16))
    assert rel_err(out2_bf16, ref2) < 3e-2

    # --- Test 3: wide F_out -> general tiled fallback for matmul 2 ----------
    N3, F_IN3, F_OUT3 = 640, 200, 640
    w3, b3 = init_gcn_params(k_p2, F_IN3, F_OUT3, bias=True)
    ref3 = ref_gcn(x2, adj2, w3, b3)
    out3 = jax.block_until_ready(graph_convolution(x2, adj2, w3, b3))
    assert out3.shape == (N3, F_OUT3)
    assert rel_err(out3, ref3) < 1e-3

    print("KERNEL_OK")
</pallas_src>

<mosaic_0001>
module attributes {stable_mosaic.version = 11 : i64} {
  func.func @_fused_gcn_bias_kernel(%arg0: i32, %arg1: memref<128x128xf32, #tpu.memory_space<vmem>>, %arg2: memref<128x128xf32, #tpu.memory_space<vmem>>, %arg3: memref<128x128xf32, #tpu.memory_space<vmem>>, %arg4: memref<1x128xf32, #tpu.memory_space<vmem>>, %arg5: memref<128x128xf32, #tpu.memory_space<vmem>>) attributes {dimension_semantics = [#tpu.dimension_semantics<arbitrary>], iteration_bounds = array<i64: 1>, scalar_prefetch = 0 : i64, scratch_operands = 0 : i64, tpu.core_type = #tpu.core_type<tc>, window_params = [{pipeline_mode = #tpu.pipeline_mode<synchronous>, transform_indices = @transform_0, window_bounds = array<i64: 128, 128>}, {pipeline_mode = #tpu.pipeline_mode<synchronous>, transform_indices = @transform_1, window_bounds = array<i64: 128, 128>}, {pipeline_mode = #tpu.pipeline_mode<synchronous>, transform_indices = @transform_2, window_bounds = array<i64: 128, 128>}, {pipeline_mode = #tpu.pipeline_mode<synchronous>, transform_indices = @transform_3, window_bounds = array<i64: 1, 128>}, {pipeline_mode = #tpu.pipeline_mode<synchronous>, transform_indices = @transform_4, window_bounds = array<i64: 128, 128>}]} {
    %c0 = arith.constant 0 : index
    %c0_0 = arith.constant 0 : index
    %0 = vector.load %arg1[%c0, %c0_0] : memref<128x128xf32, #tpu.memory_space<vmem>>, vector<128x128xf32>
    %c0_1 = arith.constant 0 : index
    %c0_2 = arith.constant 0 : index
    %1 = vector.load %arg2[%c0_1, %c0_2] : memref<128x128xf32, #tpu.memory_space<vmem>>, vector<128x128xf32>
    %cst = arith.constant dense<0.000000e+00> : vector<128x128xf32>
    %2 = tpu.matmul %0, %1, %cst {dimension_numbers = #tpu.dot_dimension_numbers<[1], [0], [0], [1], [0, 0, 1, 1], [], []>} : vector<128x128xf32>, vector<128x128xf32>, vector<128x128xf32> -> vector<128x128xf32>
    %c0_3 = arith.constant 0 : index
    %c0_4 = arith.constant 0 : index
    %3 = vector.load %arg3[%c0_3, %c0_4] : memref<128x128xf32, #tpu.memory_space<vmem>>, vector<128x128xf32>
    %cst_5 = arith.constant dense<0.000000e+00> : vector<128x128xf32>
    %4 = tpu.matmul %3, %2, %cst_5 {dimension_numbers = #tpu.dot_dimension_numbers<[1], [0], [0], [1], [0, 0, 1, 1], [], []>} : vector<128x128xf32>, vector<128x128xf32>, vector<128x128xf32> -> vector<128x128xf32>
    %c0_6 = arith.constant 0 : index
    %c0_7 = arith.constant 0 : index
    %5 = vector.load %arg4[%c0_6, %c0_7] : memref<1x128xf32, #tpu.memory_space<vmem>>, vector<1x128xf32>
    %6 = vector.broadcast %5 : vector<1x128xf32> to vector<128x128xf32>
    %7 = arith.addf %4, %6 : vector<128x128xf32>
    %c0_8 = arith.constant 0 : index
    %c0_9 = arith.constant 0 : index
    %8 = vector.load %arg5[%c0_8, %c0_9] : memref<128x128xf32, #tpu.memory_space<vmem>>, vector<128x128xf32>
    tpu.vector_store %arg5[%c0_8, %c0_9], %7 {strides = array<i32>} : memref<128x128xf32, #tpu.memory_space<vmem>>, vector<128x128xf32>,
    return
  }
  func.func @transform_0(%arg0: i32) -> (i32, i32) {
    %c0_i32 = arith.constant 0 : i32
    %c0_i32_0 = arith.constant 0 : i32
    %c0_i32_1 = arith.constant 0 : i32
    return %c0_i32, %c0_i32_0 : i32, i32
  }
  func.func @transform_1(%arg0: i32) -> (i32, i32) {
    %c0_i32 = arith.constant 0 : i32
    %c0_i32_0 = arith.constant 0 : i32
    %c0_i32_1 = arith.constant 0 : i32
    return %c0_i32, %c0_i32_0 : i32, i32
  }
  func.func @transform_2(%arg0: i32) -> (i32, i32) {
    %c0_i32 = arith.constant 0 : i32
    %c0_i32_0 = arith.constant 0 : i32
    %c0_i32_1 = arith.constant 0 : i32
    return %c0_i32, %c0_i32_0 : i32, i32
  }
  func.func @transform_3(%arg0: i32) -> (i32, i32) {
    %c0_i32 = arith.constant 0 : i32
    %c0_i32_0 = arith.constant 0 : i32
    %c0_i32_1 = arith.constant 0 : i32
    return %c0_i32, %c0_i32_0 : i32, i32
  }
  func.func @transform_4(%arg0: i32) -> (i32, i32) {
    %c0_i32 = arith.constant 0 : i32
    %c0_i32_0 = arith.constant 0 : i32
    %c0_i32_1 = arith.constant 0 : i32
    return %c0_i32, %c0_i32_0 : i32, i32
  }
}

</mosaic_0001>

<llo_original>
// kernel: graph_convolution.1
$region0: #{graph_convolution.1}
  #allocation0 [shape = 'u32[]', space=smem, size = 0x4, offset = 0x4, fixed_abs, tag = 'smem constant byte address 0x4 - core index']
  #allocation1 [shape = 'u32[72,128]{1,0:T(1,128)}', space=vmem, size = 0x9000, scoped, tag = 'internal scratch']
  %s0 = inlined_call_operand.vmem [shape: f32[128,128], index: 0, kind: input, shape index: {}]
  %s1 = inlined_call_operand.vmem [shape: f32[128,128], index: 1, kind: input, shape index: {}]
  %s2 = inlined_call_operand.vmem [shape: f32[128,128], index: 2, kind: input, shape index: {}]
  %s3 = inlined_call_operand.vmem [shape: f32[1,128], index: 3, kind: input, shape index: {}]
  %s4 = inlined_call_operand.vmem [shape: f32[128,128], index: 4, kind: output, shape index: {}]
  %s5 = sld [smem:[#allocation0]]
  $region26: #{graph_convolution.1} parent=0
    _
  %s7 = ssub.s32 1, %s5
  %s8 = scalar_select 0, %s7, %s5
  // Predicated region
  $region2: #{graph_convolution.1} parent=0 // pred_check
    _
  $region3: #{graph_convolution.1} parent=0 // pred_check_branch
    %10 = sbr.rel (0) target = $region5
  $region4: #{graph_convolution.1} parent=0 // pred_region
    _
  $region5: #{graph_convolution.1} parent=0 // pred_fallthru
    _
  // Predicated region
  $region6: #{graph_convolution.1} parent=0 // pred_check
    _
  $region7: #{graph_convolution.1} parent=0 // pred_check_branch
    %12 = sbr.rel (0) target = $region9
  $region8: #{graph_convolution.1} parent=0 // pred_region
    _
  $region9: #{graph_convolution.1} parent=0 // pred_fallthru
    _
  // Predicated region
  $region10: #{graph_convolution.1} parent=0 // pred_check
    _
  $region11: #{graph_convolution.1} parent=0 // pred_check_branch
    %14 = sbr.rel (0) target = $region13
  $region12: #{graph_convolution.1} parent=0 // pred_region
    _
  $region13: #{graph_convolution.1} parent=0 // pred_fallthru
    _
  // Predicated region
  $region14: #{graph_convolution.1} parent=0 // pred_check
    _
  $region15: #{graph_convolution.1} parent=0 // pred_check_branch
    %16 = sbr.rel (0) target = $region17
  $region16: #{graph_convolution.1} parent=0 // pred_region
    _
  $region17: #{graph_convolution.1} parent=0 // pred_fallthru
    _
  %v17 = vld [vmem:[%s0] sm:$0xff]
  %v18 = vld [vmem:[%s0 + $0x8] sm:$0xff]
  %v19 = vld [vmem:[%s0 + $0x10] sm:$0xff]
  %v20 = vld [vmem:[%s0 + $0x18] sm:$0xff]
  %v21 = vld [vmem:[%s0 + $0x20] sm:$0xff]
  %v22 = vld [vmem:[%s0 + $0x28] sm:$0xff]
  %v23 = vld [vmem:[%s0 + $0x30] sm:$0xff]
  %v24 = vld [vmem:[%s0 + $0x38] sm:$0xff]
  %v25 = vld [vmem:[%s0 + $0x40] sm:$0xff]
  %v26 = vld [vmem:[%s0 + $0x48] sm:$0xff]
  %v27 = vld [vmem:[%s0 + $0x50] sm:$0xff]
  %v28 = vld [vmem:[%s0 + $0x58] sm:$0xff]
  %v29 = vld [vmem:[%s0 + $0x60] sm:$0xff]
  %v30 = vld [vmem:[%s0 + $0x68] sm:$0xff]
  %v31 = vld [vmem:[%s0 + $0x70] sm:$0xff]
  %v32 = vld [vmem:[%s0 + $0x78] sm:$0xff]
  %v33 = vld [vmem:[%s1] sm:$0xff]
  %v34 = vld [vmem:[%s1 + $0x8] sm:$0xff]
  %v35 = vld [vmem:[%s1 + $0x10] sm:$0xff]
  %v36 = vld [vmem:[%s1 + $0x18] sm:$0xff]
  %v37 = vld [vmem:[%s1 + $0x20] sm:$0xff]
  %v38 = vld [vmem:[%s1 + $0x28] sm:$0xff]
  %v39 = vld [vmem:[%s1 + $0x30] sm:$0xff]
  %v40 = vld [vmem:[%s1 + $0x38] sm:$0xff]
  %v41 = vld [vmem:[%s1 + $0x40] sm:$0xff]
  %v42 = vld [vmem:[%s1 + $0x48] sm:$0xff]
  %v43 = vld [vmem:[%s1 + $0x50] sm:$0xff]
  %v44 = vld [vmem:[%s1 + $0x58] sm:$0xff]
  %v45 = vld [vmem:[%s1 + $0x60] sm:$0xff]
  %v46 = vld [vmem:[%s1 + $0x68] sm:$0xff]
  %v47 = vld [vmem:[%s1 + $0x70] sm:$0xff]
  %v48 = vld [vmem:[%s1 + $0x78] sm:$0xff]
  %49 = vmatpush.msra.mxu0 %v48
  %50 = vmatpush.msra.mxu0 %v47
  %51 = vmatpush.msra.mxu0 %v46
  %52 = vmatpush.msra.mxu0 %v45
  %53 = vmatpush.msra.mxu0 %v44
  %54 = vmatpush.msra.mxu0 %v43
  %55 = vmatpush.msra.mxu0 %v42
  %56 = vmatpush.msra.mxu0 %v41
  %57 = vmatpush.msra.mxu0 %v40
  %58 = vmatpush.msra.mxu0 %v39
  %59 = vmatpush.msra.mxu0 %v38
  %60 = vmatpush.msra.mxu0 %v37
  %61 = vmatpush.msra.mxu0 %v36
  %62 = vmatpush.msra.mxu0 %v35
  %63 = vmatpush.msra.mxu0 %v34
  %64 = vmatpush.msra.mxu0 %v33
  %65 = vmatmul.f32.gmra.mxu0 %v17
  %v66 = vpop.f32.mrf.mxu0
  %v67 = vadd.f32 0.0, %v66
  %68 = vmatmul.f32.gmra.mxu0 %v18
  %v69 = vpop.f32.mrf.mxu0
  %v70 = vadd.f32 0.0, %v69
  %71 = vmatmul.f32.gmra.mxu0 %v19
  %v72 = vpop.f32.mrf.mxu0
  %v73 = vadd.f32 0.0, %v72
  %74 = vmatmul.f32.gmra.mxu0 %v20
  %v75 = vpop.f32.mrf.mxu0
  %v76 = vadd.f32 0.0, %v75
  %77 = vmatmul.f32.gmra.mxu0 %v21
  %v78 = vpop.f32.mrf.mxu0
  %v79 = vadd.f32 0.0, %v78
  %80 = vmatmul.f32.gmra.mxu0 %v22
  %v81 = vpop.f32.mrf.mxu0
  %v82 = vadd.f32 0.0, %v81
  %83 = vmatmul.f32.gmra.mxu0 %v23
  %v84 = vpop.f32.mrf.mxu0
  %v85 = vadd.f32 0.0, %v84
  %86 = vmatmul.f32.gmra.mxu0 %v24
  %v87 = vpop.f32.mrf.mxu0
  %v88 = vadd.f32 0.0, %v87
  %89 = vmatmul.f32.gmra.mxu0 %v25
  %v90 = vpop.f32.mrf.mxu0
  %v91 = vadd.f32 0.0, %v90
  %92 = vmatmul.f32.gmra.mxu0 %v26
  %v93 = vpop.f32.mrf.mxu0
  %v94 = vadd.f32 0.0, %v93
  %95 = vmatmul.f32.gmra.mxu0 %v27
  %v96 = vpop.f32.mrf.mxu0
  %v97 = vadd.f32 0.0, %v96
  %98 = vmatmul.f32.gmra.mxu0 %v28
  %v99 = vpop.f32.mrf.mxu0
  %v100 = vadd.f32 0.0, %v99
  %101 = vmatmul.f32.gmra.mxu0 %v29
  %v102 = vpop.f32.mrf.mxu0
  %v103 = vadd.f32 0.0, %v102
  %104 = vmatmul.f32.gmra.mxu0 %v30
  %v105 = vpop.f32.mrf.mxu0
  %v106 = vadd.f32 0.0, %v105
  %107 = vmatmul.f32.gmra.mxu0 %v31
  %v108 = vpop.f32.mrf.mxu0
  %v109 = vadd.f32 0.0, %v108
  %110 = vmatmul.f32.gmra.mxu0 %v32
  %v111 = vpop.f32.mrf.mxu0
  %v112 = vadd.f32 0.0, %v111
  %113 = vdwg.mxu0
  %v114 = vld [vmem:[%s2] sm:$0xff]
  %v115 = vld [vmem:[%s2 + $0x8] sm:$0xff]
  %v116 = vld [vmem:[%s2 + $0x10] sm:$0xff]
  %v117 = vld [vmem:[%s2 + $0x18] sm:$0xff]
  %v118 = vld [vmem:[%s2 + $0x20] sm:$0xff]
  %v119 = vld [vmem:[%s2 + $0x28] sm:$0xff]
  %v120 = vld [vmem:[%s2 + $0x30] sm:$0xff]
  %v121 = vld [vmem:[%s2 + $0x38] sm:$0xff]
  %v122 = vld [vmem:[%s2 + $0x40] sm:$0xff]
  %v123 = vld [vmem:[%s2 + $0x48] sm:$0xff]
  %v124 = vld [vmem:[%s2 + $0x50] sm:$0xff]
  %v125 = vld [vmem:[%s2 + $0x58] sm:$0xff]
  %v126 = vld [vmem:[%s2 + $0x60] sm:$0xff]
  %v127 = vld [vmem:[%s2 + $0x68] sm:$0xff]
  %v128 = vld [vmem:[%s2 + $0x70] sm:$0xff]
  %v129 = vld [vmem:[%s2 + $0x78] sm:$0xff]
  %v130 = vld [vmem:[%s3] sm:$0x1]
  %v132 = vperm.slane %v130, 0
  %134 = vmatpush.msra.mxu0 %v112
  %135 = vmatpush.msra.mxu0 %v109
  %136 = vmatpush.msra.mxu0 %v106
  %137 = vmatpush.msra.mxu0 %v103
  %138 = vmatpush.msra.mxu0 %v100
  %139 = vmatpush.msra.mxu0 %v97
  %140 = vmatpush.msra.mxu0 %v94
  %141 = vmatpush.msra.mxu0 %v91
  %142 = vmatpush.msra.mxu0 %v88
  %143 = vmatpush.msra.mxu0 %v85
  %144 = vmatpush.msra.mxu0 %v82
  %145 = vmatpush.msra.mxu0 %v79
  %146 = vmatpush.msra.mxu0 %v76
  %147 = vmatpush.msra.mxu0 %v73
  %148 = vmatpush.msra.mxu0 %v70
  %149 = vmatpush.msra.mxu0 %v67
  %150 = vmatmul.f32.gmra.mxu0 %v114
  %v151 = vpop.f32.mrf.mxu0
  %v152 = vadd.f32 %v132, %v151
  %153 = vmatmul.f32.gmra.mxu0 %v115
  %v154 = vpop.f32.mrf.mxu0
  %v155 = vadd.f32 %v132, %v154
  %156 = vmatmul.f32.gmra.mxu0 %v116
  %v157 = vpop.f32.mrf.mxu0
  %v158 = vadd.f32 %v132, %v157
  %159 = vmatmul.f32.gmra.mxu0 %v117
  %v160 = vpop.f32.mrf.mxu0
  %v161 = vadd.f32 %v132, %v160
  %162 = vmatmul.f32.gmra.mxu0 %v118
  %v163 = vpop.f32.mrf.mxu0
  %v164 = vadd.f32 %v132, %v163
  %165 = vmatmul.f32.gmra.mxu0 %v119
  %v166 = vpop.f32.mrf.mxu0
  %v167 = vadd.f32 %v132, %v166
  %168 = vmatmul.f32.gmra.mxu0 %v120
  %v169 = vpop.f32.mrf.mxu0
  %v170 = vadd.f32 %v132, %v169
  %171 = vmatmul.f32.gmra.mxu0 %v121
  %v172 = vpop.f32.mrf.mxu0
  %v173 = vadd.f32 %v132, %v172
  %174 = vmatmul.f32.gmra.mxu0 %v122
  %v175 = vpop.f32.mrf.mxu0
  %v176 = vadd.f32 %v132, %v175
  %177 = vmatmul.f32.gmra.mxu0 %v123
  %v178 = vpop.f32.mrf.mxu0
  %v179 = vadd.f32 %v132, %v178
  %180 = vmatmul.f32.gmra.mxu0 %v124
  %v181 = vpop.f32.mrf.mxu0
  %v182 = vadd.f32 %v132, %v181
  %183 = vmatmul.f32.gmra.mxu0 %v125
  %v184 = vpop.f32.mrf.mxu0
  %v185 = vadd.f32 %v132, %v184
  %186 = vmatmul.f32.gmra.mxu0 %v126
  %v187 = vpop.f32.mrf.mxu0
  %v188 = vadd.f32 %v132, %v187
  %189 = vmatmul.f32.gmra.mxu0 %v127
  %v190 = vpop.f32.mrf.mxu0
  %v191 = vadd.f32 %v132, %v190
  %192 = vmatmul.f32.gmra.mxu0 %v128
  %v193 = vpop.f32.mrf.mxu0
  %v194 = vadd.f32 %v132, %v193
  %195 = vmatmul.f32.gmra.mxu0 %v129
  %v196 = vpop.f32.mrf.mxu0
  %v197 = vadd.f32 %v132, %v196
  %198 = vdwg.mxu0
  %199 = vst [vmem:[%s4] sm:$0xff] %v152
  %200 = vst [vmem:[%s4 + $0x8] sm:$0xff] %v155
  %201 = vst [vmem:[%s4 + $0x10] sm:$0xff] %v158
  %202 = vst [vmem:[%s4 + $0x18] sm:$0xff] %v161
  %203 = vst [vmem:[%s4 + $0x20] sm:$0xff] %v164
  %204 = vst [vmem:[%s4 + $0x28] sm:$0xff] %v167
  %205 = vst [vmem:[%s4 + $0x30] sm:$0xff] %v170
  %206 = vst [vmem:[%s4 + $0x38] sm:$0xff] %v173
  %207 = vst [vmem:[%s4 + $0x40] sm:$0xff] %v176
  %208 = vst [vmem:[%s4 + $0x48] sm:$0xff] %v179
  %209 = vst [vmem:[%s4 + $0x50] sm:$0xff] %v182
  %210 = vst [vmem:[%s4 + $0x58] sm:$0xff] %v185
  %211 = vst [vmem:[%s4 + $0x60] sm:$0xff] %v188
  %212 = vst [vmem:[%s4 + $0x68] sm:$0xff] %v191
  %213 = vst [vmem:[%s4 + $0x70] sm:$0xff] %v194
  %214 = vst [vmem:[%s4 + $0x78] sm:$0xff] %v197
  // Predicated region
  $region18: #{graph_convolution.1} parent=0 // pred_check
    _
  $region19: #{graph_convolution.1} parent=0 // pred_check_branch
    %216 = sbr.rel (0) target = $region21
  $region20: #{graph_convolution.1} parent=0 // pred_region
    _
  $region21: #{graph_convolution.1} parent=0 // pred_fallthru
    _
  // Predicated region
  $region22: #{graph_convolution.1} parent=0 // pred_check
    _
  $region23: #{graph_convolution.1} parent=0 // pred_check_branch
    %218 = sbr.rel (0) target = $region25
  $region24: #{graph_convolution.1} parent=0 // pred_region
    _
  $region25: #{graph_convolution.1} parent=0 // pred_fallthru
    _

</llo_original>
